<compile_context>
chip_gen: v6e
topology: v6e:2x2x1
jax: 0.10.0
libtpu: 0.0.40
codegen_flags: <defaults>
</compile_context>

<pallas_src>
import jax
import jax.numpy as jnp
from jax.experimental import pallas as pl
from jax.experimental.pallas import tpu as pltpu

LANE = 128


def bias_layer_kernel(params_ref, x_ref, o_ref):
    # params_ref: (2,) f32 in SMEM (scalar prefetch): [alpha, beta].
    # x_ref / o_ref: lane-dense VMEM tiles.
    alpha = params_ref[0]
    beta = params_ref[1]
    o_ref[...] = (alpha * x_ref[...] + beta).astype(o_ref.dtype)


def _lane_dense_view(x):
    """2-D view of x whose last dim is a multiple of 128 whenever possible.

    Reshape of a contiguous row-major array is a metadata-only op, so this
    costs no HBM traffic.  If the total element count is not 128-divisible we
    keep the trailing-dim layout (tail lanes handled by Pallas block masking).
    """
    total = x.size
    if total > 0 and total % LANE == 0:
        c = total // LANE
        max_d = min(c, 64)  # cols up to 64*128 = 8192 elements (<= 32 KiB f32 rows)
        d = 1
        for cand in range(max_d, 0, -1):
            if c % cand == 0:
                d = cand
                break
        cols = LANE * d
        return x.reshape(total // cols, cols)
    if x.ndim >= 2:
        return x.reshape(-1, x.shape[-1])
    return x.reshape(1, max(total, 1))


def bias_layer(x, alpha, beta, *, max_block_bytes=4 * 1024 * 1024):
    """Computes alpha * x + beta elementwise on TPU via Pallas.

    Works for any input rank; output shape/dtype match x.  alpha/beta are the
    scalar (1,) parameters of the torch BiasLayer.
    """
    orig_shape = x.shape
    x2 = _lane_dense_view(x)
    M, N = x2.shape

    itemsize = jnp.dtype(x2.dtype).itemsize
    # Sublane packing: 8 rows/vreg for 32-bit, 16 for bf16/f16, 32 for 8-bit.
    sublane = {4: 8, 2: 16, 1: 32}.get(itemsize, 8)
    row_bytes = N * itemsize
    total_bytes = M * row_bytes

    if sublane * row_bytes <= max_block_bytes:
        # Common case (always hit by the flattened view): full-width lane-dense
        # block over N, tile only the row dim to ~max_block_bytes.
        tile_n = N
        rows_budget = max(sublane, max_block_bytes // max(1, row_bytes))
        rows_budget = (rows_budget // sublane) * sublane
        tile_m = M if rows_budget >= M else rows_budget
    else:
        # Very wide rows (only reachable via the non-128-divisible fallback):
        # tile the lane dim too so a block never exceeds the VMEM budget.
        tile_m = M if M <= sublane else sublane
        cols_budget = max(LANE, max_block_bytes // max(1, tile_m * itemsize))
        tile_n = min(N, (cols_budget // LANE) * LANE)

    grid_m = pl.cdiv(M, tile_m)
    grid_n = pl.cdiv(N, tile_n)

    # Guarantee >= 2 row blocks on large-enough inputs so both v7x TensorCores
    # get work (single extra grid step on v5e/v6e, negligible).
    if grid_m == 1 and grid_n == 1 and total_bytes >= (1 << 20) and M >= 2 * sublane:
        half = pl.cdiv(M, 2)
        tile_m = ((half + sublane - 1) // sublane) * sublane
        grid_m = pl.cdiv(M, tile_m)

    # alpha/beta as a single (2,) f32 scalar-prefetch array (lands in SMEM).
    params = jnp.concatenate([
        jnp.asarray(alpha, dtype=jnp.float32).reshape(-1)[:1],
        jnp.asarray(beta, dtype=jnp.float32).reshape(-1)[:1],
    ])

    out2 = pl.pallas_call(
        bias_layer_kernel,
        out_shape=jax.ShapeDtypeStruct((M, N), x2.dtype),
        grid_spec=pltpu.PrefetchScalarGridSpec(
            num_scalar_prefetch=1,
            grid=(grid_m, grid_n),
            in_specs=[
                pl.BlockSpec((tile_m, tile_n), lambda i, j, p_ref: (i, j)),
            ],
            out_specs=pl.BlockSpec((tile_m, tile_n), lambda i, j, p_ref: (i, j)),
        ),
        compiler_params=pltpu.CompilerParams(
            # Both axes independent; lets v7x shard the grid across its 2 TCs.
            dimension_semantics=(pltpu.PARALLEL, pltpu.PARALLEL),
            # 4 MiB tiles x (2 in + 2 out buffers) + compiler scratch: set an
            # explicit limit above v5e's 16 MiB scoped default but safely under
            # v7x's 64 MiB physical VMEM.
            vmem_limit_bytes=48 << 20,
        ),
    )(params, x2)

    return out2.reshape(orig_shape)


if __name__ == "__main__":
    # nn.Parameter(torch.ones(1)) / torch.zeros(1), nudged to non-trivial values
    # so the affine transform is actually exercised.
    alpha = jnp.ones((1,), dtype=jnp.float32) * 1.25
    beta = jnp.zeros((1,), dtype=jnp.float32) + 0.5

    key = jax.random.PRNGKey(0)
    k1, k2, k3, k4 = jax.random.split(key, 4)

    # 1) BiC-style logits: 100 classes (not a multiple of 128) but total is
    #    128-divisible -> lane-dense flattened slab, fully unmasked stores.
    x = jax.random.normal(k1, (32, 100), dtype=jnp.float32)
    out = jax.block_until_ready(bias_layer(x, alpha, beta))
    ref = alpha[0] * x + beta[0]
    assert out.shape == x.shape and out.dtype == x.dtype
    assert jnp.allclose(out, ref, atol=1e-6, rtol=1e-6)

    # 2) Total not 128-divisible -> fallback (M, N) view with masked tail lanes.
    x2 = jax.random.normal(k2, (10, 100), dtype=jnp.float32)
    out2 = jax.block_until_ready(bias_layer(x2, alpha, beta))
    assert jnp.allclose(out2, alpha[0] * x2 + beta[0], atol=1e-6, rtol=1e-6)

    # 3) Tiny block budget forces a multi-step 2-D (row x lane) tiled grid.
    x3 = jax.random.normal(k3, (256, 512), dtype=jnp.float32)
    out3 = jax.block_until_ready(
        bias_layer(x3, alpha, beta, max_block_bytes=64 * 1024))
    assert jnp.allclose(out3, alpha[0] * x3 + beta[0], atol=1e-6, rtol=1e-6)

    # 4) bf16 logits: f32 compute (matches torch f32 params), bf16 store,
    #    16-row sublane packing handled.
    x4 = jax.random.normal(k4, (64, 192), dtype=jnp.bfloat16)
    out4 = jax.block_until_ready(bias_layer(x4, alpha, beta))
    ref4 = (alpha[0] * x4.astype(jnp.float32) + beta[0]).astype(jnp.bfloat16)
    assert out4.dtype == jnp.bfloat16
    assert jnp.allclose(out4.astype(jnp.float32), ref4.astype(jnp.float32),
                        atol=1e-2, rtol=1e-2)

    print("KERNEL_OK")
</pallas_src>

<mosaic_0001>
module attributes {stable_mosaic.version = 11 : i64} {
  func.func @bias_layer_kernel(%arg0: i32, %arg1: i32, %arg2: memref<2xf32, #tpu.memory_space<smem>>, %arg3: memref<1x3200xf32, #tpu.memory_space<vmem>>, %arg4: memref<1x3200xf32, #tpu.memory_space<vmem>>) attributes {dimension_semantics = [#tpu.dimension_semantics<parallel>, #tpu.dimension_semantics<parallel>], iteration_bounds = array<i64: 1, 1>, scalar_prefetch = 1 : i64, scratch_operands = 0 : i64, tpu.core_type = #tpu.core_type<tc>, window_params = [{transform_indices = @transform_0, window_bounds = array<i64: 1, 3200>}, {transform_indices = @transform_1, window_bounds = array<i64: 1, 3200>}]} {
    %c0 = arith.constant 0 : index
    %0 = memref.load %arg2[%c0] : memref<2xf32, #tpu.memory_space<smem>>
    %c1 = arith.constant 1 : index
    %1 = memref.load %arg2[%c1] : memref<2xf32, #tpu.memory_space<smem>>
    %c0_0 = arith.constant 0 : index
    %c0_1 = arith.constant 0 : index
    %2 = vector.load %arg3[%c0_0, %c0_1] : memref<1x3200xf32, #tpu.memory_space<vmem>>, vector<1x3200xf32>
    %3 = vector.broadcast %0 : f32 to vector<1x3200xf32>
    %4 = arith.mulf %3, %2 : vector<1x3200xf32>
    %5 = vector.broadcast %1 : f32 to vector<1x3200xf32>
    %6 = arith.addf %4, %5 : vector<1x3200xf32>
    %c0_2 = arith.constant 0 : index
    %c0_3 = arith.constant 0 : index
    %7 = vector.load %arg4[%c0_2, %c0_3] : memref<1x3200xf32, #tpu.memory_space<vmem>>, vector<1x3200xf32>
    tpu.vector_store %arg4[%c0_2, %c0_3], %6 {strides = array<i32>} : memref<1x3200xf32, #tpu.memory_space<vmem>>, vector<1x3200xf32>,
    return
  }
  func.func @transform_0(%arg0: i32, %arg1: i32, %arg2: memref<2xf32, #tpu.memory_space<smem>>) -> (i32, i32) {
    %c0_i32 = arith.constant 0 : i32
    return %arg0, %arg1 : i32, i32
  }
  func.func @transform_1(%arg0: i32, %arg1: i32, %arg2: memref<2xf32, #tpu.memory_space<smem>>) -> (i32, i32) {
    %c0_i32 = arith.constant 0 : i32
    return %arg0, %arg1 : i32, i32
  }
}

</mosaic_0001>

<llo_original>
// kernel: tpu_custom_call.1
$region0: #{tpu_custom_call.1}
  #allocation0 [shape = 'u32[]', space=smem, size = 0x4, offset = 0x4, fixed_abs, tag = 'smem constant byte address 0x4 - core index']
  #allocation1 [shape = 'u32[144,128]{1,0:T(1,128)}', space=vmem, size = 0x12000, scoped, tag = 'internal scratch']
  #allocation2 [shape = 's32[1]{0}', space=sflag, size = 0x4, scoped, tag = 'scoped memory for tpu_custom_call.1']
  #allocation3 [shape = 'u8[512]{0}', space=smem, size = 0x200, scoped, tag = 'prefetched SMEM operand 0']
  %s0 = inlined_call_operand.hbm [shape: f32[2], index: 0, kind: input, shape index: {}]
  %s1 = inlined_call_operand.hbm [shape: f32[1,3200], index: 1, kind: input, shape index: {}]
  %s2 = inlined_call_operand.hbm [shape: f32[1,3200], index: 2, kind: output, shape index: {}]
  %s3 = sld [smem:[#allocation0]]
  $region18: #{tpu_custom_call.1} parent=0
    _
  %s5 = ssub.s32 1, %s3
  %s6 = scalar_select 0, %s5, %s3
  %8 = dma.hbm_to_smem %s0, 16, [#allocation3], [#allocation2]
  %9 = dma.done [#allocation2], 16
  %10 = sfence
  $region1: #{tpu_custom_call.1} parent=0
    #allocation4 [shape = 'u8[12800]{0}', space=vmem, size = 0x3400, scoped, tag = 'input window, operand 1, single buffered']
    #allocation5 [shape = 's32[1]{0}', space=sflag, size = 0x4, scoped, tag = 'scoped memory for tpu_custom_call.1']
    #allocation6 [shape = 's32[1]{0}', space=sflag, size = 0x4, scoped, tag = 'scoped memory for tpu_custom_call.1']
    #allocation7 [shape = 'u8[12800]{0}', space=vmem, size = 0x3400, scoped, tag = 'output window, operand 0, single buffered']
    %11 = vsyncpa [#allocation5], 0
    %12 = vsyncpa [#allocation6], 0
    // Predicated region
    $region2: #{tpu_custom_call.1} parent=1 // pred_check
      _
    $region3: #{tpu_custom_call.1} parent=1 // pred_check_branch
      %14 = sbr.rel (0) target = $region5
    $region4: #{tpu_custom_call.1} parent=1 // pred_region
      %s16 = ssub.s32 400, 400
      %17 = vsyncadd [#allocation5], %s16
      %s19 = sshll.u32 [#allocation4], 4
      %s20 = int_to_ptr.vmem [resolvable:$true] %s19
      %22 = dma.hbm_to_vmem [thread:$0]  %s1, 400, %s20, [#allocation5]
    $region5: #{tpu_custom_call.1} parent=1 // pred_fallthru
      _
    // Predicated region
    $region6: #{tpu_custom_call.1} parent=1 // pred_check
      _
    $region7: #{tpu_custom_call.1} parent=1 // pred_check_branch
      %24 = sbr.rel (0) target = $region9
    $region8: #{tpu_custom_call.1} parent=1 // pred_region
      %25 = dma.done [#allocation5], 400
    $region9: #{tpu_custom_call.1} parent=1 // pred_fallthru
      _
    %s26 = sld [smem:[#allocation3]]
    %s27 = sld [smem:[#allocation3 + $0x1]]
    %v28 = vld [vmem:[#allocation4] sm:$0xff]
    %v29 = vld [vmem:[#allocation4 + $0x8] sm:$0xff]
    %v30 = vld [vmem:[#allocation4 + $0x10] sm:$0xff]
    %v31 = vld [vmem:[#allocation4 + $0x18] sm:$0x1]
    %v32 = vstv %s26
    %v33 = vmul.f32 %v32, %v28
    %v34 = vmul.f32 %v32, %v29
    %v35 = vmul.f32 %v32, %v30
    %v36 = vmul.f32 %v32, %v31
    %v37 = vstv %s27
    %v38 = vadd.f32 %v33, %v37
    %v39 = vadd.f32 %v34, %v37
    %v40 = vadd.f32 %v35, %v37
    %v41 = vadd.f32 %v36, %v37
    %42 = vst [vmem:[#allocation7] sm:$0xff] %v38
    %43 = vst [vmem:[#allocation7 + $0x8] sm:$0xff] %v39
    %44 = vst [vmem:[#allocation7 + $0x10] sm:$0xff] %v40
    %v45 = vlaneseq
    %vm46 = vcmp.ge.s32.totalorder %v45, 0
    %vm47 = vcmp.lt.s32.totalorder %v45, 128
    %vm48 = vmand %vm46, %vm47
    %49 = vst.msk [vmem:[#allocation7 + $0x18] sm:$0x1] %vm48, %v41
    // Predicated region
    $region10: #{tpu_custom_call.1} parent=1 // pred_check
      _
    $region11: #{tpu_custom_call.1} parent=1 // pred_check_branch
      %51 = sbr.rel (0) target = $region13
    $region12: #{tpu_custom_call.1} parent=1 // pred_region
      %s53 = ssub.s32 400, 400
      %54 = vsyncadd [#allocation6], %s53
      %s56 = sshll.u32 [#allocation7], 4
      %s57 = int_to_ptr.vmem [resolvable:$true] %s56
      %59 = dma.vmem_to_hbm [thread:$0]  %s57, 400, %s2, [#allocation6]
    $region13: #{tpu_custom_call.1} parent=1 // pred_fallthru
      _
    // Predicated region
    $region14: #{tpu_custom_call.1} parent=1 // pred_check
      _
    $region15: #{tpu_custom_call.1} parent=1 // pred_check_branch
      %61 = sbr.rel (0) target = $region17
    $region16: #{tpu_custom_call.1} parent=1 // pred_region
      %62 = dma.done [#allocation6], 400
    $region17: #{tpu_custom_call.1} parent=1 // pred_fallthru
      _
    %63 = vsyncpa [#allocation5], 1
    %64 = vsyncpa [#allocation6], 1

</llo_original>
